<compile_context>
chip_gen: v6e
topology: v6e:2x2x1
jax: 0.10.0
libtpu: 0.0.40
codegen_flags: <defaults>
</compile_context>

<pallas_src>
import jax
import jax.numpy as jnp
from jax.experimental import pallas as pl
from jax.experimental.pallas import tpu as pltpu

LANE = 128
SUBLANE = 8


def _cdiv(a, b):
    return -(-a // b)


def _round_up(n, m):
    return _cdiv(n, m) * m


def _choose_rows(M, tile_rows, min_steps):
    """Pick (tile, steps, Mpad): tile % 8 == 0, steps * tile >= M, padding kept minimal."""
    chunks8 = _cdiv(M, SUBLANE)
    steps = max(min_steps, _cdiv(M, tile_rows))   # >=2 steps when possible (v7x megacore)
    steps = max(1, min(steps, chunks8))           # but never below 8 rows per step
    tile = _round_up(_cdiv(M, steps), SUBLANE)    # padding <= a few rows, not a full tile
    return tile, steps, steps * tile


def _vmem_limit_bytes(tile, K, N):
    # double-buffered f32 x/out tiles + resident bf16 weights + f32 bias, 2x slack + 4 MiB.
    est = 2 * (tile * K * 4 + tile * N * 4 + K * N * 2 + N * 4)
    return int(min(max(2 * est + (4 << 20), 32 << 20), 64 << 20))


# ------------------------- Pallas kernel (shared by all paths) -------------------------

def linear_bias_kernel(x_ref, w_ref, b_ref, o_ref):
    # x: [tile, K] f32, w: [K, N] bf16 (pre-cast), b: [1, N] f32 -> o: [tile, N] f32
    x = x_ref[...].astype(jnp.bfloat16)                                   # bf16 MXU operand
    acc = jnp.dot(x, w_ref[...], preferred_element_type=jnp.float32)      # f32 accumulate
    o_ref[...] = (acc + b_ref[...]).astype(o_ref.dtype)                   # bias add in f32


# ------------------------- pallas_call wrappers -------------------------

def linear2d(x2d, w_bf16, b_f32, *, out_cols=None, tile_rows=512, min_steps=2):
    """x2d: [M, K] f32, w: [K, N] bf16, b: [1, N] f32  ->  [M, out_cols or N] f32."""
    M, K = x2d.shape
    N = w_bf16.shape[1]
    tile, steps, Mpad = _choose_rows(M, tile_rows, min_steps)
    xin = jnp.pad(x2d, ((0, Mpad - M), (0, 0))) if Mpad != M else x2d

    cost = pl.CostEstimate(
        flops=int(2 * Mpad * K * N),
        transcendentals=0,
        # x (f32) + weights (bf16, DMA'd once, resident) + bias + output
        bytes_accessed=int(4 * Mpad * K + 2 * K * N + 4 * N + 4 * Mpad * N),
    )
    y = pl.pallas_call(
        linear_bias_kernel,
        out_shape=jax.ShapeDtypeStruct((Mpad, N), jnp.float32),
        grid=(steps,),
        in_specs=[
            pl.BlockSpec((tile, K), lambda i: (i, 0)),
            pl.BlockSpec((K, N), lambda i: (0, 0)),    # bf16 weights resident in VMEM
            pl.BlockSpec((1, N), lambda i: (0, 0)),    # f32 bias resident in VMEM
        ],
        out_specs=pl.BlockSpec((tile, N), lambda i: (i, 0)),   # lane-dense unmasked stores
        compiler_params=pltpu.CompilerParams(
            dimension_semantics=("parallel",),
            vmem_limit_bytes=_vmem_limit_bytes(tile, K, N)),
        cost_estimate=cost,
    )(xin, w_bf16, b_f32)
    if Mpad != M:
        y = y[:M]
    if out_cols is not None and out_cols != N:
        y = y[:, :out_cols]
    return y


def linear_individual_grid(x, w_bf16, b_f32, *, out_len, tile_rows=512):
    """Fallback for large C. x: [bs, C, K] f32, w: [C, K, Tpad] bf16, b: [C, 1, Tpad] f32."""
    bs, C, K = x.shape
    Tpad = w_bf16.shape[-1]
    min_steps = 1 if C >= 2 else 2         # channel grid axis already feeds both v7x cores
    tile, steps, Bpad = _choose_rows(bs, tile_rows, min_steps)
    xc = jnp.transpose(x, (1, 0, 2))       # [C, bs, K]; lane dim untouched
    if Bpad != bs:
        xc = jnp.pad(xc, ((0, 0), (0, Bpad - bs), (0, 0)))

    cost = pl.CostEstimate(
        flops=int(2 * C * Bpad * K * Tpad),
        transcendentals=0,
        bytes_accessed=int(4 * C * Bpad * K + 2 * C * K * Tpad + 4 * C * Tpad
                           + 4 * C * Bpad * Tpad),
    )
    y = pl.pallas_call(
        linear_bias_kernel,
        out_shape=jax.ShapeDtypeStruct((C, Bpad, Tpad), jnp.float32),
        grid=(C, steps),
        in_specs=[
            pl.BlockSpec((pl.Squeezed(), tile, K), lambda c, i: (c, i, 0)),
            pl.BlockSpec((pl.Squeezed(), K, Tpad), lambda c, i: (c, 0, 0)),
            pl.BlockSpec((pl.Squeezed(), 1, Tpad), lambda c, i: (c, 0, 0)),
        ],
        out_specs=pl.BlockSpec((pl.Squeezed(), tile, Tpad), lambda c, i: (c, i, 0)),
        compiler_params=pltpu.CompilerParams(
            dimension_semantics=("parallel", "parallel"),
            vmem_limit_bytes=_vmem_limit_bytes(tile, K, Tpad)),
        cost_estimate=cost,
    )(xc, w_bf16, b_f32)
    if Bpad != bs:
        y = y[:, :bs, :]
    if Tpad != out_len:
        y = y[..., :out_len]
    return jnp.transpose(y, (1, 0, 2))     # [bs, C, out_len]


# ------------------------- parameters & forward -------------------------

def init_params(key, input_channels, input_len, out_len, individual):
    """PyTorch nn.Linear-style init: uniform(-1/sqrt(in), 1/sqrt(in)). w stored as [in, out]."""
    s = 1.0 / float(input_len) ** 0.5
    kw, kb = jax.random.split(key)
    if individual:
        w = jax.random.uniform(kw, (input_channels, input_len, out_len), jnp.float32, -s, s)
        b = jax.random.uniform(kb, (input_channels, out_len), jnp.float32, -s, s)
    else:
        w = jax.random.uniform(kw, (input_len, out_len), jnp.float32, -s, s)
        b = jax.random.uniform(kb, (out_len,), jnp.float32, -s, s)
    return {"w": w, "b": b}


def prepare_kernel_params(params, individual, *, fuse_max_weight_bytes=8 << 20,
                          fuse_max_channels=16):
    """One-time constant fold: lane-pad out_len to 128, pre-cast weights to bf16, and (for
    small-C individual mode) build the block-diagonal weight so the forward is one matmul."""
    w = params["w"].astype(jnp.float32)
    b = params["b"].astype(jnp.float32)
    out_len = int(w.shape[-1])
    Tpad = out_len if out_len % LANE == 0 else _round_up(out_len, LANE)
    pad = Tpad - out_len
    if pad:
        w = jnp.pad(w, [(0, 0)] * (w.ndim - 1) + [(0, pad)])
        b = jnp.pad(b, [(0, 0)] * (b.ndim - 1) + [(0, pad)])

    if not individual:
        return {"mode": "shared", "w": w.astype(jnp.bfloat16), "b": b[None, :],
                "out_len": out_len, "Tpad": Tpad}

    C, L, _ = w.shape
    fuse = (C * C * L * Tpad * 2 <= fuse_max_weight_bytes) and (C <= fuse_max_channels)
    if fuse:
        # Block-diagonal weight: wbd[c*L + k, c*Tpad + t] = w[c, k, t], zero elsewhere.
        eye = jnp.eye(C, dtype=w.dtype)
        wbd = jnp.einsum("cd,ckt->ckdt", eye, w).reshape(C * L, C * Tpad)
        return {"mode": "individual_fused", "w": wbd.astype(jnp.bfloat16),
                "b": b.reshape(1, C * Tpad), "out_len": out_len, "Tpad": Tpad, "C": C}
    return {"mode": "individual_grid", "w": w.astype(jnp.bfloat16),
            "b": b[:, None, :], "out_len": out_len, "Tpad": Tpad, "C": C}


def block_model_forward(x, kparams):
    """x: [bs, channels, input_len]  ->  [bs, channels, out_len]"""
    bs, C, L = x.shape
    out_len = kparams["out_len"]
    mode = kparams["mode"]
    if mode == "shared":
        y = linear2d(x.reshape(bs * C, L), kparams["w"], kparams["b"], out_cols=out_len)
        return y.reshape(bs, C, out_len)
    if mode == "individual_fused":
        Tpad = kparams["Tpad"]
        y = linear2d(x.reshape(bs, C * L), kparams["w"], kparams["b"], out_cols=None)
        y = y.reshape(bs, C, Tpad)
        return y[..., :out_len] if Tpad != out_len else y
    return linear_individual_grid(x, kparams["w"], kparams["b"], out_len=out_len)


def reference_forward(x, params, *, individual):
    """Plain-JAX reference mirroring the PyTorch module exactly (f32)."""
    if individual:
        return jnp.einsum("bcl,clt->bct", x, params["w"]) + params["b"][None, :, :]
    return x @ params["w"] + params["b"]


# ------------------------- main -------------------------

if __name__ == "__main__":
    bs, channels, input_len, out_len = 2, 4, 16, 8

    key = jax.random.PRNGKey(0)
    kx, k_shared, k_ind = jax.random.split(key, 3)
    x = jax.random.normal(kx, (bs, channels, input_len), jnp.float32)

    # ---- individual=False (shared Linear) ----
    p_shared = init_params(k_shared, channels, input_len, out_len, individual=False)
    kp_shared = prepare_kernel_params(p_shared, individual=False)
    y_shared = jax.block_until_ready(block_model_forward(x, kp_shared))
    assert y_shared.shape == (bs, channels, out_len)
    ref_shared = reference_forward(x, p_shared, individual=False)
    assert jnp.allclose(y_shared, ref_shared, rtol=2e-2, atol=2e-2), "shared-linear mismatch"

    # ---- individual=True, fused block-diagonal fast path (small C) ----
    p_ind = init_params(k_ind, channels, input_len, out_len, individual=True)
    kp_fused = prepare_kernel_params(p_ind, individual=True)
    assert kp_fused["mode"] == "individual_fused"
    y_fused = jax.block_until_ready(block_model_forward(x, kp_fused))
    assert y_fused.shape == (bs, channels, out_len)
    ref_ind = reference_forward(x, p_ind, individual=True)
    assert jnp.allclose(y_fused, ref_ind, rtol=2e-2, atol=2e-2), "individual-fused mismatch"

    # ---- individual=True, per-channel-grid fallback (forced, to exercise the path) ----
    kp_grid = prepare_kernel_params(p_ind, individual=True, fuse_max_weight_bytes=0)
    assert kp_grid["mode"] == "individual_grid"
    y_grid = jax.block_until_ready(block_model_forward(x, kp_grid))
    assert y_grid.shape == (bs, channels, out_len)
    assert jnp.allclose(y_grid, ref_ind, rtol=2e-2, atol=2e-2), "individual-grid mismatch"

    print("KERNEL_OK")
</pallas_src>

<mosaic_0001>
module attributes {stable_mosaic.version = 11 : i64} {
  func.func @linear_bias_kernel(%arg0: i32, %arg1: memref<8x16xf32, #tpu.memory_space<vmem>>, %arg2: memref<16x128xbf16, #tpu.memory_space<vmem>>, %arg3: memref<1x128xf32, #tpu.memory_space<vmem>>, %arg4: memref<8x128xf32, #tpu.memory_space<vmem>>) attributes {dimension_semantics = [#tpu.dimension_semantics<parallel>], iteration_bounds = array<i64: 1>, scalar_prefetch = 0 : i64, scratch_operands = 0 : i64, tpu.core_type = #tpu.core_type<tc>, window_params = [{transform_indices = @transform_0, window_bounds = array<i64: 8, 16>}, {pipeline_mode = #tpu.pipeline_mode<synchronous>, transform_indices = @transform_1, window_bounds = array<i64: 16, 128>}, {pipeline_mode = #tpu.pipeline_mode<synchronous>, transform_indices = @transform_2, window_bounds = array<i64: 1, 128>}, {transform_indices = @transform_3, window_bounds = array<i64: 8, 128>}]} {
    %c0 = arith.constant 0 : index
    %c0_0 = arith.constant 0 : index
    %0 = vector.load %arg1[%c0, %c0_0] : memref<8x16xf32, #tpu.memory_space<vmem>>, vector<8x16xf32>
    %1 = arith.truncf %0 : vector<8x16xf32> to vector<8x16xbf16>
    %c0_1 = arith.constant 0 : index
    %c0_2 = arith.constant 0 : index
    %2 = vector.load %arg2[%c0_1, %c0_2] : memref<16x128xbf16, #tpu.memory_space<vmem>>, vector<16x128xbf16>
    %cst = arith.constant dense<0.000000e+00> : vector<8x128xf32>
    %3 = tpu.matmul %1, %2, %cst {dimension_numbers = #tpu.dot_dimension_numbers<[1], [0], [0], [1], [0, 0, 1, 1], [], []>} : vector<8x16xbf16>, vector<16x128xbf16>, vector<8x128xf32> -> vector<8x128xf32>
    %c0_3 = arith.constant 0 : index
    %c0_4 = arith.constant 0 : index
    %4 = vector.load %arg3[%c0_3, %c0_4] : memref<1x128xf32, #tpu.memory_space<vmem>>, vector<1x128xf32>
    %5 = vector.broadcast %4 : vector<1x128xf32> to vector<8x128xf32>
    %6 = arith.addf %3, %5 : vector<8x128xf32>
    %c0_5 = arith.constant 0 : index
    %c0_6 = arith.constant 0 : index
    %7 = vector.load %arg4[%c0_5, %c0_6] : memref<8x128xf32, #tpu.memory_space<vmem>>, vector<8x128xf32>
    tpu.vector_store %arg4[%c0_5, %c0_6], %6 {strides = array<i32>} : memref<8x128xf32, #tpu.memory_space<vmem>>, vector<8x128xf32>,
    return
  }
  func.func @transform_0(%arg0: i32) -> (i32, i32) {
    %c0_i32 = arith.constant 0 : i32
    %c0_i32_0 = arith.constant 0 : i32
    return %arg0, %c0_i32 : i32, i32
  }
  func.func @transform_1(%arg0: i32) -> (i32, i32) {
    %c0_i32 = arith.constant 0 : i32
    %c0_i32_0 = arith.constant 0 : i32
    %c0_i32_1 = arith.constant 0 : i32
    return %c0_i32, %c0_i32_0 : i32, i32
  }
  func.func @transform_2(%arg0: i32) -> (i32, i32) {
    %c0_i32 = arith.constant 0 : i32
    %c0_i32_0 = arith.constant 0 : i32
    %c0_i32_1 = arith.constant 0 : i32
    return %c0_i32, %c0_i32_0 : i32, i32
  }
  func.func @transform_3(%arg0: i32) -> (i32, i32) {
    %c0_i32 = arith.constant 0 : i32
    %c0_i32_0 = arith.constant 0 : i32
    return %arg0, %c0_i32 : i32, i32
  }
}

</mosaic_0001>

<llo_original>
// kernel: tpu_custom_call.1
$region0: #{tpu_custom_call.1}
  #allocation0 [shape = 'u32[]', space=smem, size = 0x4, offset = 0x4, fixed_abs, tag = 'smem constant byte address 0x4 - core index']
  #allocation1 [shape = 'u32[144,128]{1,0:T(1,128)}', space=vmem, size = 0x12000, scoped, tag = 'internal scratch']
  %s0 = inlined_call_operand.hbm [shape: f32[8,16], index: 0, kind: input, shape index: {}]
  %s1 = inlined_call_operand.hbm [shape: bf16[16,128], index: 1, kind: input, shape index: {}]
  %s2 = inlined_call_operand.vmem [shape: f32[1,128], index: 2, kind: input, shape index: {}]
  %s3 = inlined_call_operand.hbm [shape: f32[8,128], index: 3, kind: output, shape index: {}]
  %s4 = sld [smem:[#allocation0]]
  $region30: #{tpu_custom_call.1} parent=0
    _
  %s6 = ssub.s32 1, %s4
  %s7 = scalar_select 0, %s6, %s4
  $region1: #{tpu_custom_call.1} parent=0
    #allocation2 [shape = 'u8[4096]{0}', space=vmem, size = 0x1000, scoped, tag = 'input window, operand 0, single buffered']
    #allocation3 [shape = 's32[1]{0}', space=sflag, size = 0x4, scoped, tag = 'scoped memory for tpu_custom_call.1']
    #allocation4 [shape = 's32[1]{0}', space=sflag, size = 0x4, scoped, tag = 'scoped memory for tpu_custom_call.1']
    #allocation5 [shape = 'u8[4096]{0}', space=vmem, size = 0x1000, scoped, tag = 'input window, operand 1, single buffered']
    #allocation6 [shape = 's32[1]{0}', space=sflag, size = 0x4, scoped, tag = 'scoped memory for tpu_custom_call.1']
    #allocation7 [shape = 'u8[4096]{0}', space=vmem, size = 0x1000, scoped, tag = 'output window, operand 0, single buffered']
    %8 = vsyncpa [#allocation3], 0
    %9 = vsyncpa [#allocation6], 0
    %10 = vsyncpa [#allocation4], 0
    // Predicated region
    $region2: #{tpu_custom_call.1} parent=1 // pred_check
      _
    $region3: #{tpu_custom_call.1} parent=1 // pred_check_branch
      %12 = sbr.rel (0) target = $region5
    $region4: #{tpu_custom_call.1} parent=1 // pred_region
      %s14 = ssub.s32 128, 128
      %15 = vsyncadd [#allocation3], %s14
      %s17 = sshll.u32 [#allocation2], 4
      %s18 = int_to_ptr.vmem [resolvable:$true] %s17
      %20 = dma.hbm_to_vmem [thread:$0]  %s0, 128, %s18, [#allocation3]
    $region5: #{tpu_custom_call.1} parent=1 // pred_fallthru
      _
    // Predicated region
    $region6: #{tpu_custom_call.1} parent=1 // pred_check
      _
    $region7: #{tpu_custom_call.1} parent=1 // pred_check_branch
      %22 = sbr.rel (0) target = $region9
    $region8: #{tpu_custom_call.1} parent=1 // pred_region
      %s24 = ssub.s32 128, 128
      %25 = vsyncadd [#allocation6], %s24
      %s26 = sshll.u32 [#allocation5], 4
      %s27 = int_to_ptr.vmem [resolvable:$true] %s26
      %32 = dma.hbm_to_vmem [thread:$0]  %s1, 128, %s27, [#allocation6], 64, 64, 4
    $region9: #{tpu_custom_call.1} parent=1 // pred_fallthru
      _
    // Predicated region
    $region10: #{tpu_custom_call.1} parent=1 // pred_check
      _
    $region11: #{tpu_custom_call.1} parent=1 // pred_check_branch
      %34 = sbr.rel (0) target = $region13
    $region12: #{tpu_custom_call.1} parent=1 // pred_region
      _
    $region13: #{tpu_custom_call.1} parent=1 // pred_fallthru
      _
    // Predicated region
    $region14: #{tpu_custom_call.1} parent=1 // pred_check
      _
    $region15: #{tpu_custom_call.1} parent=1 // pred_check_branch
      %36 = sbr.rel (0) target = $region17
    $region16: #{tpu_custom_call.1} parent=1 // pred_region
      %37 = dma.done [#allocation3], 128
    $region17: #{tpu_custom_call.1} parent=1 // pred_fallthru
      _
    // Predicated region
    $region18: #{tpu_custom_call.1} parent=1 // pred_check
      _
    $region19: #{tpu_custom_call.1} parent=1 // pred_check_branch
      %39 = sbr.rel (0) target = $region21
    $region20: #{tpu_custom_call.1} parent=1 // pred_region
      %40 = dma.done [#allocation6], 128
    $region21: #{tpu_custom_call.1} parent=1 // pred_fallthru
      _
    %v42 = vld [vmem:[#allocation2] sm:$0xff]
    %v43 = vpack.c.bf16 %v42, %v42
    %v44 = vld [vmem:[#allocation5] sm:$0xf]
    %v45 = vld [vmem:[#allocation5 + $0x4] sm:$0xf]
    %v46 = vld [vmem:[%s2] sm:$0x1]
    %v48 = vlaneseq
    %v49 = vshrl.u32 %v48, 7
    %v50 = vsub.s32 0, %v49
    %v51 = vrot.slane %v46, %v50
    %v55 = vunpack.c.l.b16 %v44
    %v56 = vunpack.c.l.b16 %v45
    %v57 = vpack.c.b16 %v56, %v55
    %vm59 = vcmask 130048
    %v61 = vsel %vm59, %v43, 0
    %63 = vmatprep.subr.bf16.mxu0 0
    %64 = vmatpush1.bf16.msra.mxu0 0
    %65 = vmatprep.subr.bf16.mxu0 0
    %66 = vmatpush1.bf16.msra.mxu0 0
    %67 = vmatprep.subr.bf16.mxu0 0
    %68 = vmatpush1.bf16.msra.mxu0 0
    %69 = vmatprep.subr.bf16.mxu0 0
    %70 = vmatpush1.bf16.msra.mxu0 0
    %71 = vmatprep.subr.bf16.mxu0 0
    %72 = vmatpush1.bf16.msra.mxu0 0
    %73 = vmatprep.subr.bf16.mxu0 0
    %74 = vmatpush1.bf16.msra.mxu0 0
    %75 = vmatprep.subr.bf16.mxu0 0
    %76 = vmatpush1.bf16.msra.mxu0 0
    %77 = vmatprep.subr.bf16.mxu0 0
    %78 = vmatpush1.bf16.msra.mxu0 %v57
    %79 = vmatprep.subr.bf16.mxu0 0
    %80 = vmatpush2.bf16.msra.mxu0 0
    %81 = vmatprep.subr.bf16.mxu0 0
    %82 = vmatpush2.bf16.msra.mxu0 0
    %83 = vmatprep.subr.bf16.mxu0 0
    %84 = vmatpush2.bf16.msra.mxu0 0
    %85 = vmatprep.subr.bf16.mxu0 0
    %86 = vmatpush2.bf16.msra.mxu0 0
    %87 = vmatprep.subr.bf16.mxu0 0
    %88 = vmatpush2.bf16.msra.mxu0 0
    %89 = vmatprep.subr.bf16.mxu0 0
    %90 = vmatpush2.bf16.msra.mxu0 0
    %91 = vmatprep.subr.bf16.mxu0 0
    %92 = vmatpush2.bf16.msra.mxu0 0
    %93 = vmatprep.subr.bf16.mxu0 0
    %94 = vmatpush2.bf16.msra.mxu0 0
    %95 = vmatprep.mubr.bf16.mxu0 0
    %96 = vmatmul.mubr.bf16.gmra.mxu0 %v61
    %v97 = vpop.f32.mrf.mxu0
    %v98 = vadd.f32 %v51, %v97
    %v99 = vpop.f32.mrf.mxu0
    %v100 = vpop.f32.mrf.mxu0
    %v101 = vpop.f32.mrf.mxu0
    %102 = vdwg.mxu0
    %103 = vst [vmem:[#allocation7] sm:$0xff] %v98
    // Predicated region
    $region22: #{tpu_custom_call.1} parent=1 // pred_check
      _
    $region23: #{tpu_custom_call.1} parent=1 // pred_check_branch
      %105 = sbr.rel (0) target = $region25
    $region24: #{tpu_custom_call.1} parent=1 // pred_region
      %s107 = ssub.s32 128, 128
      %108 = vsyncadd [#allocation4], %s107
      %s110 = sshll.u32 [#allocation7], 4
      %s111 = int_to_ptr.vmem [resolvable:$true] %s110
      %113 = dma.vmem_to_hbm [thread:$0]  %s111, 128, %s3, [#allocation4]
    $region25: #{tpu_custom_call.1} parent=1 // pred_fallthru
      _
    // Predicated region
    $region26: #{tpu_custom_call.1} parent=1 // pred_check
      _
    $region27: #{tpu_custom_call.1} parent=1 // pred_check_branch
      %115 = sbr.rel (0) target = $region29
    $region28: #{tpu_custom_call.1} parent=1 // pred_region
      %116 = dma.done [#allocation4], 128
    $region29: #{tpu_custom_call.1} parent=1 // pred_fallthru
      _
    %117 = vsyncpa [#allocation3], 1
    %118 = vsyncpa [#allocation6], 1
    %119 = vsyncpa [#allocation4], 1

</llo_original>
